<compile_context>
chip_gen: v6e
topology: v6e:2x2x1
jax: 0.10.0
libtpu: 0.0.40
codegen_flags: <defaults>
</compile_context>

<pallas_src>
import jax
import jax.numpy as jnp
from jax.experimental import pallas as pl
from jax.experimental.pallas import tpu as pltpu

_LANES = 128


def _single_variance_kernel(var_ref, out_ref):
    # var_ref : SMEM (1,) float32            -- learnable `variance` parameter
    # out_ref : VMEM (block_rows, 128) f32   -- filled with exp(variance * 10)
    # Scalar exp is one EUP op per grid step, fully hidden under the output DMA.
    val = jnp.exp(var_ref[0] * 10.0)
    out_ref[...] = jnp.full(out_ref.shape, val, out_ref.dtype)


def single_variance_forward(
    x: jax.Array, variance: jax.Array, *, block_rows: int = 8192
) -> jax.Array:
    """JAX/Pallas equivalent of SingleVarianceNetwork.forward.

    Args:
      x: (N, ...) array; only its leading dim is used (matches `len(x)`).
      variance: (1,) float32 parameter.
      block_rows: rows (of 128 lanes) per output tile; rounded to a multiple
        of 8. Default 8192 -> 4 MiB f32 block (8 MiB double-buffered), which
        fits every generation's scoped-VMEM default including v5e's 16 MiB.
    Returns:
      (N, 1) float32 array filled with exp(variance * 10.0).
    """
    n = x.shape[0]
    if n == 0:
        return jnp.zeros((0, 1), jnp.float32)

    # Lane-dense internal layout: N scalars -> (rows, 128) slab.
    rows = pl.cdiv(n, _LANES)

    # Enforce the (8, 128) tiling rule on caller-supplied block_rows and shrink
    # the tile for tiny inputs (no point allocating a 4 MiB buffer for 3 rows).
    block_rows = max(8, (block_rows // 8) * 8)
    block_rows = min(block_rows, ((rows + 7) // 8) * 8)

    grid = (pl.cdiv(rows, block_rows),)  # ragged trailing block handled by Pallas

    out = pl.pallas_call(
        _single_variance_kernel,
        out_shape=jax.ShapeDtypeStruct((rows, _LANES), jnp.float32),
        grid=grid,
        in_specs=[pl.BlockSpec(memory_space=pltpu.MemorySpace.SMEM)],
        out_specs=pl.BlockSpec((block_rows, _LANES), lambda i: (i, 0)),
        compiler_params=pltpu.CompilerParams(
            dimension_semantics=("parallel",),
        ),
        cost_estimate=pl.CostEstimate(
            flops=0,
            transcendentals=grid[0],
            bytes_accessed=rows * _LANES * 4,
        ),
    )(variance.astype(jnp.float32))

    # Layout plumbing: contiguous (rows, 128) -> (rows*128, 1). The tail slice
    # is only emitted when N is not lane-aligned (otherwise pure reshape).
    out = out.reshape(-1, 1)
    if n % _LANES != 0:
        out = out[:n]
    return out


def get_variance(variance: jax.Array) -> jax.Array:
    """Pure-JAX equivalent of SingleVarianceNetwork.get_variance (glue, not hot path)."""
    return jnp.clip(jnp.exp(variance.astype(jnp.float32) * 10.0), 1e-06, 1e06)


if __name__ == "__main__":
    key = jax.random.PRNGKey(0)

    # Module parameter: variance = init_val * ones(1); deterministic init.
    init_val = 0.05
    variance = jnp.full((1,), init_val, dtype=jnp.float32)

    # Case 1: N not a multiple of 128 (exercises the ragged block + tail slice).
    x = jax.random.normal(key, (300, 3), dtype=jnp.float32)
    out = jax.block_until_ready(single_variance_forward(x, variance))
    ref = jnp.ones((x.shape[0], 1), jnp.float32) * jnp.exp(variance * 10.0)
    assert out.shape == (x.shape[0], 1), out.shape
    assert out.dtype == jnp.float32, out.dtype
    assert jnp.allclose(out, ref, rtol=1e-6, atol=1e-6)

    # Case 2: lane-aligned N (exercises the no-slice, pure-reshape path).
    x2 = jax.random.normal(key, (512, 3), dtype=jnp.float32)
    out2 = jax.block_until_ready(single_variance_forward(x2, variance))
    ref2 = jnp.ones((x2.shape[0], 1), jnp.float32) * jnp.exp(variance * 10.0)
    assert out2.shape == (x2.shape[0], 1), out2.shape
    assert jnp.allclose(out2, ref2, rtol=1e-6, atol=1e-6)

    # Sanity-check get_variance glue as well.
    gv = get_variance(variance)
    assert jnp.allclose(gv, jnp.clip(jnp.exp(variance * 10.0), 1e-06, 1e06))

    print("KERNEL_OK")
</pallas_src>

<mosaic_0001>
module attributes {stable_mosaic.version = 11 : i64} {
  func.func @_single_variance_kernel(%arg0: i32, %arg1: memref<1xf32, #tpu.memory_space<smem>>, %arg2: memref<8x128xf32, #tpu.memory_space<vmem>>) attributes {dimension_semantics = [#tpu.dimension_semantics<parallel>], iteration_bounds = array<i64: 1>, scalar_prefetch = 0 : i64, scratch_operands = 0 : i64, tpu.core_type = #tpu.core_type<tc>, window_params = [{transform_indices = @transform_0, window_bounds = array<i64: 1>}, {transform_indices = @transform_1, window_bounds = array<i64: 8, 128>}]} {
    %c0 = arith.constant 0 : index
    %0 = memref.load %arg1[%c0] : memref<1xf32, #tpu.memory_space<smem>>
    %cst = arith.constant 1.000000e+01 : f32
    %1 = arith.mulf %0, %cst : f32
    %2 = math.exp %1 : f32
    %3 = vector.broadcast %2 : f32 to vector<8x128xf32>
    %c0_0 = arith.constant 0 : index
    %c0_1 = arith.constant 0 : index
    %4 = vector.load %arg2[%c0_0, %c0_1] : memref<8x128xf32, #tpu.memory_space<vmem>>, vector<8x128xf32>
    tpu.vector_store %arg2[%c0_0, %c0_1], %3 {strides = array<i32>} : memref<8x128xf32, #tpu.memory_space<vmem>>, vector<8x128xf32>,
    return
  }
  func.func @transform_0(%arg0: i32) -> i32 {
    %c0_i32 = arith.constant 0 : i32
    %c0_i32_0 = arith.constant 0 : i32
    return %c0_i32 : i32
  }
  func.func @transform_1(%arg0: i32) -> (i32, i32) {
    %c0_i32 = arith.constant 0 : i32
    %c0_i32_0 = arith.constant 0 : i32
    return %arg0, %c0_i32 : i32, i32
  }
}

</mosaic_0001>

<llo_original>
// kernel: tpu_custom_call.1
$region0: #{tpu_custom_call.1}
  #allocation0 [shape = 'u32[]', space=smem, size = 0x4, offset = 0x4, fixed_abs, tag = 'smem constant byte address 0x4 - core index']
  #allocation1 [shape = 'u32[144,128]{1,0:T(1,128)}', space=vmem, size = 0x12000, scoped, tag = 'internal scratch']
  #allocation2 [shape = 'f32[1]{0:T(128)S(6)}', space=smem, size = 0x200, scoped, tag = 'scoped memory for tpu_custom_call.1']
  %s0 = inlined_call_operand.<no memory space> [shape: f32[1], index: 0, kind: input, shape index: {}]
  %s1 = inlined_call_operand.hbm [shape: f32[3,128], index: 1, kind: output, shape index: {}]
  %s2 = sld [smem:[#allocation0]]
  $region14: #{tpu_custom_call.1} parent=0
    _
  %s4 = ssub.s32 1, %s2
  %s5 = scalar_select 0, %s4, %s2
  %6 = sst [smem:[#allocation2]] %s0
  $region1: #{tpu_custom_call.1} parent=0
    #allocation3 [shape = 'u8[4096]{0}', space=vmem, size = 0x1000, scoped, tag = 'output window, operand 0, single buffered']
    #allocation4 [shape = 's32[1]{0}', space=sflag, size = 0x4, scoped, tag = 'scoped memory for tpu_custom_call.1']
    %7 = vsyncpa [#allocation4], 0
    // Predicated region
    $region2: #{tpu_custom_call.1} parent=1 // pred_check
      _
    $region3: #{tpu_custom_call.1} parent=1 // pred_check_branch
      %9 = sbr.rel (0) target = $region5
    $region4: #{tpu_custom_call.1} parent=1 // pred_region
      _
    $region5: #{tpu_custom_call.1} parent=1 // pred_fallthru
      _
    %s10 = sld [smem:[#allocation2]]
    %s11 = smul.f32 %s10, 10.0
    %v12 = vstv %s11
    %v13 = vmul.f32 %v12, 1.442695
    %v14 = vpow.pop %v13
    %s15 = vtos %v14
    %v16 = vstv %s15
    %17 = vst [vmem:[#allocation3] sm:$0xff] %v16
    // Predicated region
    $region6: #{tpu_custom_call.1} parent=1 // pred_check
      _
    $region7: #{tpu_custom_call.1} parent=1 // pred_check_branch
      %19 = sbr.rel (0) target = $region9
    $region8: #{tpu_custom_call.1} parent=1 // pred_region
      %s21 = ssub.s32 128, 64
      %22 = vsyncadd [#allocation4], %s21
      %s23 = sshll.u32 [#allocation3], 4
      %s24 = int_to_ptr.vmem [resolvable:$true] %s23
      %29 = dma.vmem_to_hbm [thread:$0]  %s24, 64, %s1, [#allocation4], 64, 64, 4
    $region9: #{tpu_custom_call.1} parent=1 // pred_fallthru
      _
    // Predicated region
    $region10: #{tpu_custom_call.1} parent=1 // pred_check
      _
    $region11: #{tpu_custom_call.1} parent=1 // pred_check_branch
      %31 = sbr.rel (0) target = $region13
    $region12: #{tpu_custom_call.1} parent=1 // pred_region
      %32 = dma.done [#allocation4], 128
    $region13: #{tpu_custom_call.1} parent=1 // pred_fallthru
      _
    %33 = vsyncpa [#allocation4], 1

</llo_original>
